<compile_context>
chip_gen: v6e
topology: v6e:2x2x1
jax: 0.10.0
libtpu: 0.0.40
codegen_flags: <defaults>
</compile_context>

<pallas_src>
import jax
import jax.numpy as jnp
from jax.experimental import pallas as pl
from jax.experimental.pallas import tpu as pltpu


def _round_up(x, m):
    return (x + m - 1) // m * m


def _pick_tile(dim128, cap):
    """Largest multiple of 128 that is <= cap and divides dim128 (a multiple
    of 128).  Guarantees dim128 % tile == 0, i.e. no dropped columns."""
    for cand in range(min(cap, dim128), 127, -128):
        if dim128 % cand == 0:
            return cand
    return 128


# ----------------------------- Pallas kernel --------------------------------
def conv_bn_relu_kernel(p_ref, w_ref, shift_ref, o_ref, acc_ref):
    # p_ref:     (tm, tk) bf16 im2col patch tile
    # w_ref:     (tk, tn) bf16 conv weight tile (BN scale pre-folded)
    # shift_ref: (1, tn)  f32  folded BN shift (beta - mean*scale)
    # o_ref:     (tm, tn) bf16 conv + BN + ReLU output tile
    # acc_ref:   (tm, tn) f32  accumulator, resident across the K axis
    k = pl.program_id(2)
    prod = jnp.dot(p_ref[...], w_ref[...], preferred_element_type=jnp.float32)

    @pl.when(k == 0)
    def _init():
        acc_ref[...] = prod            # direct write: no zero-store + re-read

    @pl.when(k > 0)
    def _accumulate():
        acc_ref[...] += prod

    @pl.when(k == pl.num_programs(2) - 1)
    def _finalize():
        o_ref[...] = jnp.maximum(acc_ref[...] + shift_ref[...],
                                 0.0).astype(o_ref.dtype)


# ------------------------------ JAX glue -------------------------------------
def _im2col_nchw_bf16(x, kh, kw, stride, pad):
    """x: (B, C, H, W) -> bf16 patches (B*Ho*Wo, C*kh*kw), Ho, Wo.

    K ordered (c, tap) with tap = i*kw + j; cast to bf16 first so every
    im2col intermediate in HBM is half-size."""
    B, C, H, W = x.shape
    x = x.astype(jnp.bfloat16)
    xp = jnp.pad(x, ((0, 0), (0, 0), (pad, pad), (pad, pad)))
    Ho = (H + 2 * pad - kh) // stride + 1
    Wo = (W + 2 * pad - kw) // stride + 1
    cols = []
    for i in range(kh):
        for j in range(kw):
            cols.append(xp[:, :, i:i + stride * Ho:stride,
                           j:j + stride * Wo:stride])   # (B, C, Ho, Wo)
    cols = jnp.stack(cols, axis=0)                       # (kh*kw, B, C, Ho, Wo)
    cols = jnp.transpose(cols, (1, 3, 4, 2, 0))          # (B, Ho, Wo, C, kh*kw)
    return cols.reshape(B * Ho * Wo, C * kh * kw), Ho, Wo


def fold_and_pad_params(weight, bn_gamma, bn_beta, bn_mean, bn_var, *,
                        eps=1e-5, tk_max=512, tn_max=1024):
    """BN-fold, bf16-cast and lane-pad the conv weights ONCE.

    These are parameters, not activations — do NOT redo this per forward."""
    C_out, C_in, kh, kw = weight.shape
    K, N = C_in * kh * kw, C_out

    scale = bn_gamma / jnp.sqrt(bn_var + eps)                       # (N,)
    shift = bn_beta - bn_mean * scale                               # (N,)
    w_mat = jnp.transpose(weight.reshape(C_out, C_in, kh * kw), (1, 2, 0))
    w_mat = w_mat.reshape(K, N) * scale[None, :]

    K_pad = _round_up(K, 128)
    N_pad = _round_up(N, 128)
    tk = _pick_tile(K_pad, tk_max)     # divides K_pad exactly
    tn = _pick_tile(N_pad, tn_max)     # divides N_pad exactly

    w_p = jnp.pad(w_mat.astype(jnp.bfloat16), ((0, K_pad - K), (0, N_pad - N)))
    shift_p = jnp.pad(shift.astype(jnp.float32)[None, :],
                      ((0, 0), (0, N_pad - N)))
    return dict(w_p=w_p, shift_p=shift_p, kh=kh, kw=kw, K=K, N=N,
                K_pad=K_pad, N_pad=N_pad, tk=tk, tn=tn)


def backbone_body(x, prep, *, stride=4, pad=1, tm_max=1024,
                  channels_last=True):
    """Representative ResNet 'layer4' stage: conv3x3(stride) + BN + ReLU.

    x: (B, C_in, H, W) float32 NCHW.
    Returns NHWC bf16 (B, Ho, Wo, C_out) by default (lane-dense, no extra
    transpose pass); channels_last=False gives PyTorch-style NCHW.
    """
    kh, kw = prep["kh"], prep["kw"]
    K, N = prep["K"], prep["N"]
    K_pad, N_pad = prep["K_pad"], prep["N_pad"]
    tk, tn = prep["tk"], prep["tn"]

    patches, Ho, Wo = _im2col_nchw_bf16(x, kh, kw, stride, pad)
    B = x.shape[0]
    M = patches.shape[0]

    # Single M tile when it fits (weights stream through VMEM exactly once);
    # split into 2 tiles if the parallel grid would otherwise be degenerate on
    # a 2-TensorCore chip (v7x) and M is big enough to bother.
    n_blocks = N_pad // tn
    num_m = -(-M // tm_max)
    if num_m == 1 and n_blocks == 1 and M >= 256:
        num_m = 2
    tm = _round_up(-(-M // num_m), 16)        # >=16 sublanes for bf16 tiles
    M_pad = num_m * tm

    patches_p = jnp.pad(patches, ((0, M_pad - M), (0, K_pad - K)))

    grid = (num_m, n_blocks, K_pad // tk)
    cost = pl.CostEstimate(
        flops=2 * M_pad * K_pad * N_pad,
        transcendentals=0,
        bytes_accessed=(M_pad * K_pad * 2 * n_blocks      # A re-read per N blk
                        + K_pad * N_pad * 2 * num_m       # B re-read per M blk
                        + M_pad * N_pad * 2               # bf16 output
                        + N_pad * 4))

    out_flat = pl.pallas_call(
        conv_bn_relu_kernel,
        out_shape=jax.ShapeDtypeStruct((M_pad, N_pad), jnp.bfloat16),
        grid_spec=pltpu.PrefetchScalarGridSpec(
            num_scalar_prefetch=0,
            grid=grid,
            in_specs=[
                pl.BlockSpec((tm, tk), lambda i, j, k: (i, k)),
                pl.BlockSpec((tk, tn), lambda i, j, k: (k, j)),
                pl.BlockSpec((1, tn), lambda i, j, k: (0, j)),
            ],
            out_specs=pl.BlockSpec((tm, tn), lambda i, j, k: (i, j)),
            scratch_shapes=[pltpu.VMEM((tm, tn), jnp.float32)],
        ),
        compiler_params=pltpu.CompilerParams(
            dimension_semantics=("parallel", "parallel", "arbitrary"),
            vmem_limit_bytes=48 * 1024 * 1024),   # headroom vs v7x 64 MiB VMEM
        cost_estimate=cost,
    )(patches_p, prep["w_p"], prep["shift_p"])

    out = out_flat[:M, :N].reshape(B, Ho, Wo, N)          # NHWC, lane-dense
    if channels_last:
        return out
    # TODO(synk): downstream DETR consumers should read channel-last; this
    # transpose is a full extra HBM round trip kept only for NCHW compat.
    return jnp.transpose(out, (0, 3, 1, 2))


def interpolate_mask_nearest(mask, out_hw):
    """F.interpolate(m[None].float(), size=out_hw, mode='nearest').bool()[0].

    Pure index selection (no arithmetic) -> stays in JAX glue."""
    B, H, W = mask.shape
    h, w = out_hw
    idx_h = (jnp.arange(h) * H) // h
    idx_w = (jnp.arange(w) * W) // w
    return mask[:, idx_h, :][:, :, idx_w].astype(jnp.bool_)


def backbone_base_forward(tensors, mask, prep, *, channels_last=True):
    """BackboneBase.forward with return_interm_layers=False:
    returns {'0': (feature_map, resized_mask)}."""
    x = backbone_body(tensors, prep, channels_last=channels_last)
    spatial = x.shape[1:3] if channels_last else x.shape[-2:]
    m = interpolate_mask_nearest(mask, spatial)
    return {"0": (x, m)}


# ------------------------------- main ----------------------------------------
if __name__ == "__main__":
    B, C_in, H, W = 2, 4, 16, 16
    C_out = 32  # "num_channels" of the synthetic backbone

    key = jax.random.PRNGKey(0)
    k_x, k_w, k_g, k_b, k_m, k_v = jax.random.split(key, 6)

    tensors = jax.random.normal(k_x, (B, C_in, H, W), dtype=jnp.float32)
    # Synthetic padding mask: right/bottom quarter is padding (True).
    col = jnp.arange(W) >= (3 * W // 4)
    row = jnp.arange(H) >= (3 * H // 4)
    mask = jnp.broadcast_to(row[:, None] | col[None, :], (B, H, W))

    params = {
        "weight":   0.1 * jax.random.normal(k_w, (C_out, C_in, 3, 3), dtype=jnp.float32),
        "bn_gamma": 1.0 + 0.05 * jax.random.normal(k_g, (C_out,), dtype=jnp.float32),
        "bn_beta":  0.05 * jax.random.normal(k_b, (C_out,), dtype=jnp.float32),
        "bn_mean":  0.05 * jax.random.normal(k_m, (C_out,), dtype=jnp.float32),
        "bn_var":   jnp.abs(1.0 + 0.05 * jax.random.normal(k_v, (C_out,), dtype=jnp.float32)),
    }

    # Parameter folding / padding happens once, outside the per-forward path.
    prep = fold_and_pad_params(params["weight"], params["bn_gamma"],
                               params["bn_beta"], params["bn_mean"],
                               params["bn_var"])

    out = backbone_base_forward(tensors, mask, prep)
    feat, out_mask = out["0"]
    jax.block_until_ready(feat)
    jax.block_until_ready(out_mask)

    assert feat.shape == (B, 4, 4, C_out) and feat.dtype == jnp.bfloat16
    assert out_mask.shape == (B, 4, 4) and out_mask.dtype == jnp.bool_

    # Numerical check against an independent pure-JAX f32 reference (kernel
    # uses bf16 operands / output with f32 accumulation).
    scale_ref = params["bn_gamma"] / jnp.sqrt(params["bn_var"] + 1e-5)
    shift_ref = params["bn_beta"] - params["bn_mean"] * scale_ref
    ref = jax.lax.conv_general_dilated(
        tensors, params["weight"], window_strides=(4, 4),
        padding=((1, 1), (1, 1)),
        dimension_numbers=("NCHW", "OIHW", "NCHW"))
    ref = jnp.maximum(ref * scale_ref[None, :, None, None]
                      + shift_ref[None, :, None, None], 0.0)
    ref_nhwc = jnp.transpose(ref, (0, 2, 3, 1))
    assert jnp.max(jnp.abs(feat.astype(jnp.float32) - ref_nhwc)) < 0.1

    # Mask reference: nearest downsample 16x16 -> 4x4.
    ref_mask = mask[:, ::4, :][:, :, ::4]
    assert bool(jnp.all(out_mask == ref_mask))

    print("KERNEL_OK")
</pallas_src>

<mosaic_0001>
module attributes {stable_mosaic.version = 11 : i64} {
  func.func @conv_bn_relu_kernel(%arg0: i32, %arg1: i32, %arg2: i32, %arg3: memref<32x128xbf16, #tpu.memory_space<vmem>>, %arg4: memref<128x128xbf16, #tpu.memory_space<vmem>>, %arg5: memref<1x128xf32, #tpu.memory_space<vmem>>, %arg6: memref<32x128xbf16, #tpu.memory_space<vmem>>, %arg7: memref<32x128xf32, #tpu.memory_space<vmem>>) attributes {dimension_semantics = [#tpu.dimension_semantics<parallel>, #tpu.dimension_semantics<parallel>, #tpu.dimension_semantics<arbitrary>], iteration_bounds = array<i64: 1, 1, 1>, scalar_prefetch = 0 : i64, scratch_operands = 1 : i64, tpu.core_type = #tpu.core_type<tc>, window_params = [{transform_indices = @transform_0, window_bounds = array<i64: 32, 128>}, {transform_indices = @transform_1, window_bounds = array<i64: 128, 128>}, {transform_indices = @transform_2, window_bounds = array<i64: 1, 128>}, {transform_indices = @transform_3, window_bounds = array<i64: 32, 128>}]} {
    %c0 = arith.constant 0 : index
    %c0_0 = arith.constant 0 : index
    %0 = vector.load %arg3[%c0, %c0_0] : memref<32x128xbf16, #tpu.memory_space<vmem>>, vector<32x128xbf16>
    %c0_1 = arith.constant 0 : index
    %c0_2 = arith.constant 0 : index
    %1 = vector.load %arg4[%c0_1, %c0_2] : memref<128x128xbf16, #tpu.memory_space<vmem>>, vector<128x128xbf16>
    %cst = arith.constant dense<0.000000e+00> : vector<32x128xf32>
    %2 = tpu.matmul %0, %1, %cst {dimension_numbers = #tpu.dot_dimension_numbers<[1], [0], [0], [1], [0, 0, 1, 1], [], []>} : vector<32x128xbf16>, vector<128x128xbf16>, vector<32x128xf32> -> vector<32x128xf32>
    %c0_i32 = arith.constant 0 : i32
    %3 = arith.cmpi eq, %arg2, %c0_i32 : i32
    %4 = arith.extui %3 : i1 to i32
    %c0_i32_3 = arith.constant 0 : i32
    %5 = arith.cmpi ne, %4, %c0_i32_3 : i32
    scf.if %5 {
      %c0_8 = arith.constant 0 : index
      %c0_9 = arith.constant 0 : index
      %12 = vector.load %arg7[%c0_8, %c0_9] : memref<32x128xf32, #tpu.memory_space<vmem>>, vector<32x128xf32>
      tpu.vector_store %arg7[%c0_8, %c0_9], %2 {strides = array<i32>} : memref<32x128xf32, #tpu.memory_space<vmem>>, vector<32x128xf32>,
    } else {
    }
    %c0_i32_4 = arith.constant 0 : i32
    %6 = arith.cmpi sgt, %arg2, %c0_i32_4 : i32
    %7 = arith.extui %6 : i1 to i32
    %c0_i32_5 = arith.constant 0 : i32
    %8 = arith.cmpi ne, %7, %c0_i32_5 : i32
    scf.if %8 {
      %c0_8 = arith.constant 0 : index
      %c0_9 = arith.constant 0 : index
      %12 = vector.load %arg7[%c0_8, %c0_9] : memref<32x128xf32, #tpu.memory_space<vmem>>, vector<32x128xf32>
      %13 = arith.addf %12, %2 : vector<32x128xf32>
      %c0_10 = arith.constant 0 : index
      %c0_11 = arith.constant 0 : index
      %14 = vector.load %arg7[%c0_10, %c0_11] : memref<32x128xf32, #tpu.memory_space<vmem>>, vector<32x128xf32>
      tpu.vector_store %arg7[%c0_10, %c0_11], %13 {strides = array<i32>} : memref<32x128xf32, #tpu.memory_space<vmem>>, vector<32x128xf32>,
    } else {
    }
    %c0_i32_6 = arith.constant 0 : i32
    %9 = arith.cmpi eq, %arg2, %c0_i32_6 : i32
    %10 = arith.extui %9 : i1 to i32
    %c0_i32_7 = arith.constant 0 : i32
    %11 = arith.cmpi ne, %10, %c0_i32_7 : i32
    scf.if %11 {
      %c0_8 = arith.constant 0 : index
      %c0_9 = arith.constant 0 : index
      %12 = vector.load %arg7[%c0_8, %c0_9] : memref<32x128xf32, #tpu.memory_space<vmem>>, vector<32x128xf32>
      %c0_10 = arith.constant 0 : index
      %c0_11 = arith.constant 0 : index
      %13 = vector.load %arg5[%c0_10, %c0_11] : memref<1x128xf32, #tpu.memory_space<vmem>>, vector<1x128xf32>
      %14 = vector.broadcast %13 : vector<1x128xf32> to vector<32x128xf32>
      %15 = arith.addf %12, %14 : vector<32x128xf32>
      %cst_12 = arith.constant 0.000000e+00 : f32
      %16 = vector.broadcast %cst_12 : f32 to vector<32x128xf32>
      %17 = arith.maximumf %15, %16 : vector<32x128xf32>
      %18 = arith.truncf %17 : vector<32x128xf32> to vector<32x128xbf16>
      %c0_13 = arith.constant 0 : index
      %c0_14 = arith.constant 0 : index
      %19 = vector.load %arg6[%c0_13, %c0_14] : memref<32x128xbf16, #tpu.memory_space<vmem>>, vector<32x128xbf16>
      tpu.vector_store %arg6[%c0_13, %c0_14], %18 {strides = array<i32>} : memref<32x128xbf16, #tpu.memory_space<vmem>>, vector<32x128xbf16>,
    } else {
    }
    return
  }
  func.func @transform_0(%arg0: i32, %arg1: i32, %arg2: i32) -> (i32, i32) {
    %c0_i32 = arith.constant 0 : i32
    return %arg0, %arg2 : i32, i32
  }
  func.func @transform_1(%arg0: i32, %arg1: i32, %arg2: i32) -> (i32, i32) {
    %c0_i32 = arith.constant 0 : i32
    return %arg2, %arg1 : i32, i32
  }
  func.func @transform_2(%arg0: i32, %arg1: i32, %arg2: i32) -> (i32, i32) {
    %c0_i32 = arith.constant 0 : i32
    %c0_i32_0 = arith.constant 0 : i32
    return %c0_i32, %arg1 : i32, i32
  }
  func.func @transform_3(%arg0: i32, %arg1: i32, %arg2: i32) -> (i32, i32) {
    %c0_i32 = arith.constant 0 : i32
    return %arg0, %arg1 : i32, i32
  }
}

</mosaic_0001>

<llo_original>
// kernel: tpu_custom_call.1
$region0: #{tpu_custom_call.1}
  #allocation0 [shape = 'u32[]', space=smem, size = 0x4, offset = 0x4, fixed_abs, tag = 'smem constant byte address 0x4 - core index']
  #allocation1 [shape = 'u32[144,128]{1,0:T(1,128)}', space=vmem, size = 0x12000, scoped, tag = 'internal scratch']
  #allocation2 [shape = 'f32[32,128]{1,0:T(8,128)}', space=vmem, size = 0x4000, scoped, tag = 'scratch operand']
  %s0 = inlined_call_operand.hbm [shape: bf16[32,128], index: 0, kind: input, shape index: {}]
  %s1 = inlined_call_operand.hbm [shape: bf16[128,128], index: 1, kind: input, shape index: {}]
  %s2 = inlined_call_operand.vmem [shape: f32[1,128], index: 2, kind: input, shape index: {}]
  %s3 = inlined_call_operand.hbm [shape: bf16[32,128], index: 3, kind: output, shape index: {}]
  %s4 = sld [smem:[#allocation0]]
  $region42: #{tpu_custom_call.1} parent=0
    _
  %s6 = ssub.s32 1, %s4
  %s7 = scalar_select 0, %s6, %s4
  $region1: #{tpu_custom_call.1} parent=0
    #allocation3 [shape = 'u8[8192]{0}', space=vmem, size = 0x2000, scoped, tag = 'input window, operand 0, single buffered']
    #allocation4 [shape = 's32[1]{0}', space=sflag, size = 0x4, scoped, tag = 'scoped memory for tpu_custom_call.1']
    #allocation5 [shape = 's32[1]{0}', space=sflag, size = 0x4, scoped, tag = 'scoped memory for tpu_custom_call.1']
    #allocation6 [shape = 'u8[32768]{0}', space=vmem, size = 0x8000, scoped, tag = 'input window, operand 1, single buffered']
    #allocation7 [shape = 's32[1]{0}', space=sflag, size = 0x4, scoped, tag = 'scoped memory for tpu_custom_call.1']
    #allocation8 [shape = 'u8[8192]{0}', space=vmem, size = 0x2000, scoped, tag = 'output window, operand 0, single buffered']
    %8 = vsyncpa [#allocation4], 0
    %9 = vsyncpa [#allocation7], 0
    %10 = vsyncpa [#allocation5], 0
    // Predicated region
    $region2: #{tpu_custom_call.1} parent=1 // pred_check
      _
    $region3: #{tpu_custom_call.1} parent=1 // pred_check_branch
      %12 = sbr.rel (0) target = $region5
    $region4: #{tpu_custom_call.1} parent=1 // pred_region
      %s14 = ssub.s32 256, 256
      %15 = vsyncadd [#allocation4], %s14
      %s16 = sshll.u32 [#allocation3], 4
      %s17 = int_to_ptr.vmem [resolvable:$true] %s16
      %22 = dma.hbm_to_vmem [thread:$0]  %s0, 256, %s17, [#allocation4], 64, 64, 4
    $region5: #{tpu_custom_call.1} parent=1 // pred_fallthru
      _
    // Predicated region
    $region6: #{tpu_custom_call.1} parent=1 // pred_check
      _
    $region7: #{tpu_custom_call.1} parent=1 // pred_check_branch
      %24 = sbr.rel (0) target = $region9
    $region8: #{tpu_custom_call.1} parent=1 // pred_region
      %s26 = ssub.s32 1024, 1024
      %27 = vsyncadd [#allocation7], %s26
      %s28 = sshll.u32 [#allocation6], 4
      %s29 = int_to_ptr.vmem [resolvable:$true] %s28
      %34 = dma.hbm_to_vmem [thread:$0]  %s1, 1024, %s29, [#allocation7], 64, 64, 4
    $region9: #{tpu_custom_call.1} parent=1 // pred_fallthru
      _
    // Predicated region
    $region10: #{tpu_custom_call.1} parent=1 // pred_check
      _
    $region11: #{tpu_custom_call.1} parent=1 // pred_check_branch
      %36 = sbr.rel (0) target = $region13
    $region12: #{tpu_custom_call.1} parent=1 // pred_region
      _
    $region13: #{tpu_custom_call.1} parent=1 // pred_fallthru
      _
    // Predicated region
    $region14: #{tpu_custom_call.1} parent=1 // pred_check
      _
    $region15: #{tpu_custom_call.1} parent=1 // pred_check_branch
      %38 = sbr.rel (0) target = $region17
    $region16: #{tpu_custom_call.1} parent=1 // pred_region
      %39 = dma.done [#allocation4], 256
    $region17: #{tpu_custom_call.1} parent=1 // pred_fallthru
      _
    // Predicated region
    $region18: #{tpu_custom_call.1} parent=1 // pred_check
      _
    $region19: #{tpu_custom_call.1} parent=1 // pred_check_branch
      %41 = sbr.rel (0) target = $region21
    $region20: #{tpu_custom_call.1} parent=1 // pred_region
      %42 = dma.done [#allocation7], 1024
    $region21: #{tpu_custom_call.1} parent=1 // pred_fallthru
      _
    %v44 = vld [vmem:[#allocation3] sm:$0xf]
    %v45 = vld [vmem:[#allocation3 + $0x4] sm:$0xf]
    %v46 = vld [vmem:[#allocation3 + $0x8] sm:$0xf]
    %v47 = vld [vmem:[#allocation3 + $0xc] sm:$0xf]
    %v48 = vld [vmem:[#allocation6] sm:$0xf]
    %v49 = vld [vmem:[#allocation6 + $0x4] sm:$0xf]
    %v50 = vld [vmem:[#allocation6 + $0x8] sm:$0xf]
    %v51 = vld [vmem:[#allocation6 + $0xc] sm:$0xf]
    %v52 = vld [vmem:[#allocation6 + $0x10] sm:$0xf]
    %v53 = vld [vmem:[#allocation6 + $0x14] sm:$0xf]
    %v54 = vld [vmem:[#allocation6 + $0x18] sm:$0xf]
    %v55 = vld [vmem:[#allocation6 + $0x1c] sm:$0xf]
    %v56 = vld [vmem:[#allocation6 + $0x20] sm:$0xf]
    %v57 = vld [vmem:[#allocation6 + $0x24] sm:$0xf]
    %v58 = vld [vmem:[#allocation6 + $0x28] sm:$0xf]
    %v59 = vld [vmem:[#allocation6 + $0x2c] sm:$0xf]
    %v60 = vld [vmem:[#allocation6 + $0x30] sm:$0xf]
    %v61 = vld [vmem:[#allocation6 + $0x34] sm:$0xf]
    %v62 = vld [vmem:[#allocation6 + $0x38] sm:$0xf]
    %v63 = vld [vmem:[#allocation6 + $0x3c] sm:$0xf]
    %v68 = vunpack.c.l.b16 %v44
    %v69 = vunpack.c.l.b16 %v45
    %v70 = vunpack.c.l.b16 %v46
    %v71 = vunpack.c.l.b16 %v47
    %v72 = vpack.c.b16 %v69, %v68
    %v73 = vpack.c.b16 %v71, %v70
    %v92 = vunpack.c.l.b16 %v48
    %v93 = vunpack.c.l.b16 %v49
    %v94 = vunpack.c.l.b16 %v50
    %v95 = vunpack.c.l.b16 %v51
    %v96 = vunpack.c.l.b16 %v52
    %v97 = vunpack.c.l.b16 %v53
    %v98 = vunpack.c.l.b16 %v54
    %v99 = vunpack.c.l.b16 %v55
    %v100 = vunpack.c.l.b16 %v56
    %v101 = vunpack.c.l.b16 %v57
    %v102 = vunpack.c.l.b16 %v58
    %v103 = vunpack.c.l.b16 %v59
    %v104 = vunpack.c.l.b16 %v60
    %v105 = vunpack.c.l.b16 %v61
    %v106 = vunpack.c.l.b16 %v62
    %v107 = vunpack.c.l.b16 %v63
    %v108 = vpack.c.b16 %v93, %v92
    %v109 = vpack.c.b16 %v95, %v94
    %v110 = vpack.c.b16 %v97, %v96
    %v111 = vpack.c.b16 %v99, %v98
    %v112 = vpack.c.b16 %v101, %v100
    %v113 = vpack.c.b16 %v103, %v102
    %v114 = vpack.c.b16 %v105, %v104
    %v115 = vpack.c.b16 %v107, %v106
    %124 = vmatprep.subr.bf16.mxu0 0
    %125 = vmatpush1.bf16.msra.mxu0 %v115
    %126 = vmatprep.subr.bf16.mxu0 0
    %127 = vmatpush1.bf16.msra.mxu0 %v114
    %128 = vmatprep.subr.bf16.mxu0 0
    %129 = vmatpush1.bf16.msra.mxu0 %v113
    %130 = vmatprep.subr.bf16.mxu0 0
    %131 = vmatpush1.bf16.msra.mxu0 %v112
    %132 = vmatprep.subr.bf16.mxu0 0
    %133 = vmatpush1.bf16.msra.mxu0 %v111
    %134 = vmatprep.subr.bf16.mxu0 0
    %135 = vmatpush1.bf16.msra.mxu0 %v110
    %136 = vmatprep.subr.bf16.mxu0 0
    %137 = vmatpush1.bf16.msra.mxu0 %v109
    %138 = vmatprep.subr.bf16.mxu0 0
    %139 = vmatpush1.bf16.msra.mxu0 %v108
    %140 = vmatprep.subr.bf16.mxu0 0
    %141 = vmatpush2.bf16.msra.mxu0 0
    %142 = vmatprep.subr.bf16.mxu0 0
    %143 = vmatpush2.bf16.msra.mxu0 0
    %144 = vmatprep.subr.bf16.mxu0 0
    %145 = vmatpush2.bf16.msra.mxu0 0
    %146 = vmatprep.subr.bf16.mxu0 0
    %147 = vmatpush2.bf16.msra.mxu0 0
    %148 = vmatprep.subr.bf16.mxu0 0
    %149 = vmatpush2.bf16.msra.mxu0 0
    %150 = vmatprep.subr.bf16.mxu0 0
    %151 = vmatpush2.bf16.msra.mxu0 0
    %152 = vmatprep.subr.bf16.mxu0 0
    %153 = vmatpush2.bf16.msra.mxu0 0
    %154 = vmatprep.subr.bf16.mxu0 0
    %155 = vmatpush2.bf16.msra.mxu0 0
    %156 = vmatprep.mubr.bf16.mxu0 0
    %157 = vmatmul.mubr.bf16.gmra.mxu0 %v72
    %v158 = vpop.f32.mrf.mxu0
    %v159 = vadd.f32 0.0, %v158
    %v160 = vpop.f32.mrf.mxu0
    %v161 = vpop.f32.mrf.mxu0
    %v162 = vadd.f32 0.0, %v161
    %v163 = vpop.f32.mrf.mxu0
    %164 = vmatprep.mubr.bf16.mxu0 0
    %165 = vmatmul.mubr.bf16.gmra.mxu0 %v73
    %v166 = vpop.f32.mrf.mxu0
    %v167 = vadd.f32 0.0, %v166
    %v168 = vpop.f32.mrf.mxu0
    %v169 = vpop.f32.mrf.mxu0
    %v170 = vadd.f32 0.0, %v169
    %v171 = vpop.f32.mrf.mxu0
    %172 = vdwg.mxu0
    %p173 = scmp.eq.s32.totalorder 0, 0
    // Predicated region
    $region22: #{tpu_custom_call.1} parent=1 // pred_check
      %p174 = pneg %p173
    $region23: #{tpu_custom_call.1} parent=1 // pred_check_branch
      %176 = sbr.rel (%p174) target = $region25
    $region24: #{tpu_custom_call.1} parent=1 // pred_region
      %177 = vst [vmem:[#allocation2] sm:$0xff] %v159
      %178 = vst [vmem:[#allocation2 + $0x8] sm:$0xff] %v162
      %179 = vst [vmem:[#allocation2 + $0x10] sm:$0xff] %v167
      %180 = vst [vmem:[#allocation2 + $0x18] sm:$0xff] %v170
    $region25: #{tpu_custom_call.1} parent=1 // pred_fallthru
      _
    %p181 = scmp.gt.s32.totalorder 0, 0
    // Predicated region
    $region26: #{tpu_custom_call.1} parent=1 // pred_check
      %p182 = pneg %p181
    $region27: #{tpu_custom_call.1} parent=1 // pred_check_branch
      %184 = sbr.rel (%p182) target = $region29
    $region28: #{tpu_custom_call.1} parent=1 // pred_region
      %v185 = vld [vmem:[#allocation2] sm:$0xff]
      %v186 = vld [vmem:[#allocation2 + $0x8] sm:$0xff]
      %v187 = vld [vmem:[#allocation2 + $0x10] sm:$0xff]
      %v188 = vld [vmem:[#allocation2 + $0x18] sm:$0xff]
      %v189 = vadd.f32 %v185, %v159
      %v190 = vadd.f32 %v186, %v162
      %v191 = vadd.f32 %v187, %v167
      %v192 = vadd.f32 %v188, %v170
      %193 = vst [vmem:[#allocation2] sm:$0xff] %v189
      %194 = vst [vmem:[#allocation2 + $0x8] sm:$0xff] %v190
      %195 = vst [vmem:[#allocation2 + $0x10] sm:$0xff] %v191
      %196 = vst [vmem:[#allocation2 + $0x18] sm:$0xff] %v192
    $region29: #{tpu_custom_call.1} parent=1 // pred_fallthru
      _
    // Predicated region
    $region30: #{tpu_custom_call.1} parent=1 // pred_check
      %p197 = pneg %p173
    $region31: #{tpu_custom_call.1} parent=1 // pred_check_branch
      %199 = sbr.rel (%p197) target = $region33
    $region32: #{tpu_custom_call.1} parent=1 // pred_region
      %v200 = vld [vmem:[#allocation2] sm:$0xff]
      %v201 = vld [vmem:[#allocation2 + $0x8] sm:$0xff]
      %v202 = vld [vmem:[#allocation2 + $0x10] sm:$0xff]
      %v203 = vld [vmem:[#allocation2 + $0x18] sm:$0xff]
      %v204 = vld [vmem:[%s2] sm:$0x1]
      %v206 = vlaneseq
      %v207 = vshrl.u32 %v206, 7
      %v208 = vsub.s32 0, %v207
      %v209 = vrot.slane %v204, %v208
      %v211 = vadd.f32 %v200, %v209
      %v212 = vadd.f32 %v201, %v209
      %v213 = vadd.f32 %v202, %v209
      %v214 = vadd.f32 %v203, %v209
      %v215 = vmax.f32 %v211, 0.0
      %v216 = vmax.f32 %v212, 0.0
      %v217 = vmax.f32 %v213, 0.0
      %v218 = vmax.f32 %v214, 0.0
      %v219 = vpack.c.bf16 %v216, %v215
      %v220 = vpack.c.bf16 %v218, %v217
      %v223 = vunpack.c.l.b16 %v219
      %v224 = vunpack.c.h.b16 %v219
      %v225 = vunpack.c.l.b16 %v220
      %v226 = vunpack.c.h.b16 %v220
      %v227 = vpack.c.b16 %v223, %v223
      %v228 = vpack.c.b16 %v224, %v224
      %v229 = vpack.c.b16 %v225, %v225
      %v230 = vpack.c.b16 %v226, %v226
      %235 = vst [vmem:[#allocation8] sm:$0xf] %v227
      %236 = vst [vmem:[#allocation8 + $0x4] sm:$0xf] %v228
      %237 = vst [vmem:[#allocation8 + $0x8] sm:$0xf] %v229
      %238 = vst [vmem:[#allocation8 + $0xc] sm:$0xf] %v230
    $region33: #{tpu_custom_call.1} parent=1 // pred_fallthru
      _
    // Predicated region
    $region34: #{tpu_custom_call.1} parent=1 // pred_check
      _
    $region35: #{tpu_custom_call.1} parent=1 // pred_check_branch
      %240 = sbr.rel (0) target = $region37
    $region36: #{tpu_custom_call.1} parent=1 // pred_region
      %s242 = ssub.s32 256, 256
      %243 = vsyncadd [#allocation5], %s242
      %s244 = sshll.u32 [#allocation8], 4
      %s245 = int_to_ptr.vmem [resolvable:$true] %s244
      %250 = dma.vmem_to_hbm [thread:$0]  %s245, 256, %s3, [#allocation5], 64, 64, 4
    $region37: #{tpu_custom_call.1} parent=1 // pred_fallthru
      _
    // Predicated region
    $region38: #{tpu_custom_call.1} parent=1 // pred_check
      _
    $region39: #{tpu_custom_call.1} parent=1 // pred_check_branch
      %252 = sbr.rel (0) target = $region41
    $region40: #{tpu_custom_call.1} parent=1 // pred_region
      %253 = dma.done [#allocation5], 256
    $region41: #{tpu_custom_call.1} parent=1 // pred_fallthru
      _
    %254 = vsyncpa [#allocation4], 1
    %255 = vsyncpa [#allocation7], 1
    %256 = vsyncpa [#allocation5], 1

</llo_original>
